<compile_context>
chip_gen: v7x
topology: tpu7x:2x2x1
jax: 0.10.0
libtpu: 0.0.40
codegen_flags: <defaults>
</compile_context>

<pallas_src>
import functools

import jax
import jax.numpy as jnp
from jax import lax
from jax.experimental import pallas as pl
from jax.experimental.pallas import tpu as pltpu


def _channel_attention_kernel(x_ref, w1t_ref, w2t_ref, o_ref, sum_ref, max_ref,
                              *, inv_hw, tail_valid):
    # x_ref: (TB, C, THW)   w1t_ref: (C, Hd)   w2t_ref: (Hd, C)
    # o_ref: (TB, C)        sum_ref/max_ref: (TB, C) f32 scratch accumulators
    # tail_valid: valid lanes in the last spatial tile (0 -> every tile full).
    s = pl.program_id(1)
    last = pl.num_programs(1) - 1

    @pl.when(s == 0)
    def _init():
        sum_ref[...] = jnp.zeros_like(sum_ref)
        # NOTE: -inf init / fill assumes a floating-point input dtype (true for
        # this op); integer inputs would need a different identity.
        max_ref[...] = jnp.full_like(max_ref, -jnp.inf)

    x = x_ref[...]                                   # input dtype, no upcast

    def _accumulate(x_sum, x_max):
        # The lane reduction folds 128-lane chunks on the VPU; only the final
        # per-row cross-lane step touches the XLU (per row per step, not per
        # element), so the steady state stays HBM-bound.  Lane-wide partial
        # accumulators were not worth the extra VMEM ld/st traffic.
        sum_ref[...] += jnp.sum(x_sum, axis=-1, dtype=jnp.float32)
        max_ref[...] = jnp.maximum(max_ref[...],
                                   jnp.max(x_max, axis=-1).astype(jnp.float32))

    if tail_valid == 0:                              # static: no ragged tail
        _accumulate(x, x)
    else:
        @pl.when(s < last)                           # steady state: unmasked
        def _steady():
            _accumulate(x, x)

        @pl.when(s == last)                          # mask only the tail tile
        def _tail():
            lane = lax.broadcasted_iota(jnp.int32, x.shape, 2)
            valid = lane < tail_valid
            _accumulate(jnp.where(valid, x, jnp.zeros_like(x)),
                        jnp.where(valid, x, jnp.full_like(x, -jnp.inf)))

    @pl.when(s == last)
    def _finalize():
        tb = sum_ref.shape[0]
        x_avg = sum_ref[...] * inv_hw                # (TB, C) f32
        x_mx = max_ref[...]                          # (TB, C) f32

        w1t = w1t_ref[...].astype(jnp.float32)       # (C, Hd)
        w2t = w2t_ref[...].astype(jnp.float32)       # (Hd, C)

        # Fused MLP over the stacked (avg, max) rows: one matmul pair.  All ops
        # are row-wise, so garbage in batch-padded rows (B % TB != 0) cannot
        # leak into valid rows; padded rows are sliced off by the wrapper.
        v = jnp.concatenate([x_avg, x_mx], axis=0)   # (2*TB, C)
        h = jnp.maximum(
            jnp.dot(v, w1t, preferred_element_type=jnp.float32), 0.0)
        y = jnp.dot(h, w2t, preferred_element_type=jnp.float32)  # (2*TB, C)
        logits = y[:tb] + y[tb:]
        o_ref[...] = jax.nn.sigmoid(logits).astype(o_ref.dtype)


def _vmem_budgets():
    """(per_buffer_budget, vmem_limit_cap) for the current TPU generation."""
    cap = 64 * 1024 * 1024
    try:
        cap = int(pltpu.get_tpu_info().vmem_capacity_bytes)
    except Exception:                         # query unavailable: stay conservative
        pass
    if cap >= 100 * 1024 * 1024:              # v5e / v6e: 128 MiB VMEM
        return 28 * 1024 * 1024, 96 * 1024 * 1024
    return 8 * 1024 * 1024, 48 * 1024 * 1024  # v7x: 64 MiB VMEM


def _choose_tiles(B, C, HW, itemsize, per_buffer_budget):
    lane = 128
    # Batch tile (leading dim, any value is layout-legal): aim for >= 2 batch
    # blocks whenever B >= 2 so the "parallel" axis feeds both v7x TensorCores.
    if B <= 1:
        tb = 1
    elif B <= 8:
        tb = (B + 1) // 2
    else:
        tb = 8
    # Spatial tile: full extent whenever it fits the budget (single step, no
    # masking); otherwise a multiple of 128 with a >= ~2 KiB per-row segment.
    min_thw = min(HW, max(lane, -(-(2048 // itemsize) // lane) * lane))
    max_thw = (per_buffer_budget // max(1, tb * C * itemsize)) // lane * lane
    max_thw = max(max_thw, min_thw)
    if HW <= max_thw:
        thw = HW                              # single full-extent spatial tile
    else:
        thw = None
        for cand in range(max_thw, min_thw - 1, -lane):
            if HW % cand == 0:                # prefer an exact divisor (no tail)
                thw = cand
                break
        if thw is None:
            thw = max_thw                     # ragged tail -> masked last step
    # Very large C: shrink the batch tile rather than blowing the budget.
    if tb > 1 and tb * C * thw * itemsize > per_buffer_budget:
        tb = max(1, per_buffer_budget // max(1, C * thw * itemsize))
    return tb, thw


def channel_attention(x, w1, w2, *, spatial_tile=None):
    """x: (B, C, H, W) NCHW.  w1: (hidden, C), w2: (C, hidden) -- the two
    bias-free 1x1 conv weights with their trailing 1x1 spatial dims squeezed.
    Returns sigmoid(mlp(avgpool(x)) + mlp(maxpool(x))) of shape (B, C, 1, 1)."""
    B, C, H, W = x.shape
    hidden = w1.shape[0]
    HW = H * W

    x_flat = x.reshape(B, C, HW)
    w1t = w1.T                                       # (C, hidden)
    w2t = w2.T                                       # (hidden, C)

    itemsize = jnp.dtype(x.dtype).itemsize
    per_buffer_budget, vmem_cap = _vmem_budgets()
    tb, thw = _choose_tiles(B, C, HW, itemsize, per_buffer_budget)
    if spatial_tile is not None:                     # test hook: force tiling
        thw = min(HW, max(128, (spatial_tile // 128) * 128))
    tail_valid = HW % thw                            # 0 -> no ragged tail
    gb, gs = pl.cdiv(B, tb), pl.cdiv(HW, thw)

    # VMEM budget: double-buffered x tiles + once-DMA'd resident weights
    # (constant index_map) + out block + f32 scratch, 2x headroom, per-gen cap.
    x_tile_bytes = tb * C * thw * itemsize
    w_bytes = (w1t.size * jnp.dtype(w1t.dtype).itemsize
               + w2t.size * jnp.dtype(w2t.dtype).itemsize)
    out_bytes = tb * C * itemsize
    scratch_bytes = 2 * tb * C * 4
    needed = 2 * x_tile_bytes + w_bytes + 2 * out_bytes + scratch_bytes
    vmem_limit = int(min(max(2 * needed, 32 * 1024 * 1024), vmem_cap))

    # TODO(synk): on v5e, if a very large C ever forces thw down to ~128-512,
    # add pipeline_mode=pl.Buffered(3) on the x BlockSpec to hide DMA latency.

    kernel = functools.partial(_channel_attention_kernel,
                               inv_hw=1.0 / float(HW), tail_valid=tail_valid)

    out = pl.pallas_call(
        kernel,
        # (batch_blocks, TB, C): the block's trailing two dims equal the full
        # array dims, so any TB (including TB < 8) is layout-legal.  Padded
        # rows (when B % TB != 0) are sliced off below.
        out_shape=jax.ShapeDtypeStruct((gb, tb, C), x.dtype),
        grid_spec=pltpu.PrefetchScalarGridSpec(
            num_scalar_prefetch=0,
            grid=(gb, gs),
            in_specs=[
                pl.BlockSpec((tb, C, thw), lambda b, s: (b, 0, s)),
                pl.BlockSpec((C, hidden), lambda b, s: (0, 0)),   # resident
                pl.BlockSpec((hidden, C), lambda b, s: (0, 0)),   # resident
            ],
            out_specs=pl.BlockSpec((None, tb, C), lambda b, s: (b, 0, 0)),
            scratch_shapes=[
                pltpu.VMEM((tb, C), jnp.float32),    # running sum
                pltpu.VMEM((tb, C), jnp.float32),    # running max
            ],
        ),
        compiler_params=pltpu.CompilerParams(
            dimension_semantics=("parallel", "arbitrary"),
            vmem_limit_bytes=vmem_limit,
        ),
    )(x_flat, w1t, w2t)

    return out.reshape(gb * tb, C)[:B].reshape(B, C, 1, 1)


def channel_attention_ref(x, w1, w2):
    """Pure-JAX reference mirroring the PyTorch forward."""
    x_avg = jnp.mean(x, axis=(2, 3))  # (B, C)
    x_max = jnp.max(x, axis=(2, 3))   # (B, C)

    def mlp(v):
        h = jnp.maximum(v @ w1.T, 0.0)
        return h @ w2.T

    return jax.nn.sigmoid(mlp(x_avg) + mlp(x_max))[:, :, None, None]


def _make_inputs(key, B, C, H, W, ratio=16):
    hidden = C // ratio if C >= ratio else 1
    kx, k1, k2 = jax.random.split(key, 3)
    x = jax.random.normal(kx, (B, C, H, W), dtype=jnp.float32)
    bound1 = (1.0 / C) ** 0.5
    bound2 = (1.0 / hidden) ** 0.5
    w1 = jax.random.uniform(k1, (hidden, C), minval=-bound1, maxval=bound1,
                            dtype=jnp.float32)
    w2 = jax.random.uniform(k2, (C, hidden), minval=-bound2, maxval=bound2,
                            dtype=jnp.float32)
    return x, w1, w2


if __name__ == "__main__":
    key = jax.random.PRNGKey(0)
    k_a, k_b, k_c = jax.random.split(key, 3)

    # Test 1: module-spec shapes (B=2, C=4, 16x16, ratio=16 -> hidden=1).
    x, w1, w2 = _make_inputs(k_a, B=2, C=4, H=16, W=16)
    out = jax.block_until_ready(channel_attention(x, w1, w2))
    ref = channel_attention_ref(x, w1, w2)
    assert out.shape == (2, 4, 1, 1)
    assert jnp.allclose(out, ref, atol=1e-5, rtol=1e-5), "mismatch (small case)"

    # Test 2: moderate HW -> single full-extent spatial tile (no mask, 1 step).
    x2, w1b, w2b = _make_inputs(k_b, B=4, C=32, H=56, W=56)
    out2 = jax.block_until_ready(channel_attention(x2, w1b, w2b))
    ref2 = channel_attention_ref(x2, w1b, w2b)
    assert out2.shape == (4, 32, 1, 1)
    assert jnp.allclose(out2, ref2, atol=1e-5, rtol=1e-5), "mismatch (full-tile case)"

    # Test 3: forced spatial tiling -> multi-step accumulation + pl.when-gated
    # ragged-tail masking path (HW=1600, thw=640 -> 3 steps, 320-lane tail).
    x3, w1c, w2c = _make_inputs(k_c, B=2, C=8, H=40, W=40)
    out3 = jax.block_until_ready(channel_attention(x3, w1c, w2c, spatial_tile=640))
    ref3 = channel_attention_ref(x3, w1c, w2c)
    assert out3.shape == (2, 8, 1, 1)
    assert jnp.allclose(out3, ref3, atol=1e-5, rtol=1e-5), "mismatch (masked-tail case)"

    print("KERNEL_OK")
</pallas_src>

<mosaic_0001>
module attributes {stable_mosaic.version = 11 : i64} {
  func.func @_channel_attention_kernel(%arg0: i32, %arg1: i32, %arg2: memref<1x4x256xf32, #tpu.memory_space<vmem>>, %arg3: memref<4x1xf32, #tpu.memory_space<vmem>>, %arg4: memref<1x4xf32, #tpu.memory_space<vmem>>, %arg5: memref<1x1x4xf32, #tpu.memory_space<vmem>>, %arg6: memref<1x4xf32, #tpu.memory_space<vmem>>, %arg7: memref<1x4xf32, #tpu.memory_space<vmem>>) attributes {dimension_semantics = [#tpu.dimension_semantics<parallel>, #tpu.dimension_semantics<arbitrary>], iteration_bounds = array<i64: 2, 1>, scalar_prefetch = 0 : i64, scratch_operands = 2 : i64, tpu.core_type = #tpu.core_type<tc>, window_params = [{transform_indices = @transform_0, window_bounds = array<i64: 1, 4, 256>}, {pipeline_mode = #tpu.pipeline_mode<synchronous>, transform_indices = @transform_1, window_bounds = array<i64: 4, 1>}, {pipeline_mode = #tpu.pipeline_mode<synchronous>, transform_indices = @transform_2, window_bounds = array<i64: 1, 4>}, {transform_indices = @transform_3, window_bounds = array<i64: 1, 1, 4>}]} {
    %c0_i32 = arith.constant 0 : i32
    %0 = arith.cmpi eq, %arg1, %c0_i32 : i32
    %1 = arith.extui %0 : i1 to i32
    %c0_i32_0 = arith.constant 0 : i32
    %2 = arith.cmpi ne, %1, %c0_i32_0 : i32
    scf.if %2 {
      %cst_14 = arith.constant 0.000000e+00 : f32
      %15 = vector.broadcast %cst_14 : f32 to vector<1x4xf32>
      %c0_15 = arith.constant 0 : index
      %c0_16 = arith.constant 0 : index
      %16 = vector.load %arg6[%c0_15, %c0_16] : memref<1x4xf32, #tpu.memory_space<vmem>>, vector<1x4xf32>
      tpu.vector_store %arg6[%c0_15, %c0_16], %15 {strides = array<i32>} : memref<1x4xf32, #tpu.memory_space<vmem>>, vector<1x4xf32>,
      %cst_17 = arith.constant 0xFF800000 : f32
      %17 = vector.broadcast %cst_17 : f32 to vector<1x4xf32>
      %c0_18 = arith.constant 0 : index
      %c0_19 = arith.constant 0 : index
      %18 = vector.load %arg7[%c0_18, %c0_19] : memref<1x4xf32, #tpu.memory_space<vmem>>, vector<1x4xf32>
      tpu.vector_store %arg7[%c0_18, %c0_19], %17 {strides = array<i32>} : memref<1x4xf32, #tpu.memory_space<vmem>>, vector<1x4xf32>,
    } else {
    }
    %c0 = arith.constant 0 : index
    %c0_1 = arith.constant 0 : index
    %c0_2 = arith.constant 0 : index
    %3 = vector.load %arg2[%c0, %c0_1, %c0_2] : memref<1x4x256xf32, #tpu.memory_space<vmem>>, vector<1x4x256xf32>
    %c0_3 = arith.constant 0 : index
    %c0_4 = arith.constant 0 : index
    %4 = vector.load %arg6[%c0_3, %c0_4] : memref<1x4xf32, #tpu.memory_space<vmem>>, vector<1x4xf32>
    %cst = arith.constant dense<0.000000e+00> : vector<1x4xf32>
    %5 = vector.multi_reduction <add>, %3, %cst [2] : vector<1x4x256xf32> to vector<1x4xf32>
    %6 = arith.addf %4, %5 : vector<1x4xf32>
    %c0_5 = arith.constant 0 : index
    %c0_6 = arith.constant 0 : index
    %7 = vector.load %arg6[%c0_5, %c0_6] : memref<1x4xf32, #tpu.memory_space<vmem>>, vector<1x4xf32>
    tpu.vector_store %arg6[%c0_5, %c0_6], %6 {strides = array<i32>} : memref<1x4xf32, #tpu.memory_space<vmem>>, vector<1x4xf32>,
    %c0_7 = arith.constant 0 : index
    %c0_8 = arith.constant 0 : index
    %8 = vector.load %arg7[%c0_7, %c0_8] : memref<1x4xf32, #tpu.memory_space<vmem>>, vector<1x4xf32>
    %cst_9 = arith.constant dense<0xFF800000> : vector<1x4xf32>
    %9 = vector.multi_reduction <maximumf>, %3, %cst_9 [2] : vector<1x4x256xf32> to vector<1x4xf32>
    %10 = arith.maximumf %8, %9 : vector<1x4xf32>
    %c0_10 = arith.constant 0 : index
    %c0_11 = arith.constant 0 : index
    %11 = vector.load %arg7[%c0_10, %c0_11] : memref<1x4xf32, #tpu.memory_space<vmem>>, vector<1x4xf32>
    tpu.vector_store %arg7[%c0_10, %c0_11], %10 {strides = array<i32>} : memref<1x4xf32, #tpu.memory_space<vmem>>, vector<1x4xf32>,
    %c0_i32_12 = arith.constant 0 : i32
    %12 = arith.cmpi eq, %arg1, %c0_i32_12 : i32
    %13 = arith.extui %12 : i1 to i32
    %c0_i32_13 = arith.constant 0 : i32
    %14 = arith.cmpi ne, %13, %c0_i32_13 : i32
    scf.if %14 {
      %c0_14 = arith.constant 0 : index
      %c0_15 = arith.constant 0 : index
      %15 = vector.load %arg6[%c0_14, %c0_15] : memref<1x4xf32, #tpu.memory_space<vmem>>, vector<1x4xf32>
      %cst_16 = arith.constant 3.906250e-03 : f32
      %16 = vector.broadcast %cst_16 : f32 to vector<1x4xf32>
      %17 = arith.mulf %15, %16 : vector<1x4xf32>
      %c0_17 = arith.constant 0 : index
      %c0_18 = arith.constant 0 : index
      %18 = vector.load %arg7[%c0_17, %c0_18] : memref<1x4xf32, #tpu.memory_space<vmem>>, vector<1x4xf32>
      %c0_19 = arith.constant 0 : index
      %c0_20 = arith.constant 0 : index
      %19 = vector.load %arg3[%c0_19, %c0_20] : memref<4x1xf32, #tpu.memory_space<vmem>>, vector<4x1xf32>
      %c0_21 = arith.constant 0 : index
      %c0_22 = arith.constant 0 : index
      %20 = vector.load %arg4[%c0_21, %c0_22] : memref<1x4xf32, #tpu.memory_space<vmem>>, vector<1x4xf32>
      %21 = tpu.concatenate %17, %18 in 0 : vector<1x4xf32>, vector<1x4xf32> -> vector<2x4xf32>
      %cst_23 = arith.constant dense<0.000000e+00> : vector<2x1xf32>
      %22 = tpu.matmul %21, %19, %cst_23 {dimension_numbers = #tpu.dot_dimension_numbers<[1], [0], [0], [1], [0, 0, 1, 1], [], []>} : vector<2x4xf32>, vector<4x1xf32>, vector<2x1xf32> -> vector<2x1xf32>
      %cst_24 = arith.constant 0.000000e+00 : f32
      %23 = vector.broadcast %cst_24 : f32 to vector<2x1xf32>
      %24 = arith.maximumf %22, %23 : vector<2x1xf32>
      %cst_25 = arith.constant dense<0.000000e+00> : vector<2x4xf32>
      %25 = tpu.matmul %24, %20, %cst_25 {dimension_numbers = #tpu.dot_dimension_numbers<[1], [0], [0], [1], [0, 0, 1, 1], [], []>} : vector<2x1xf32>, vector<1x4xf32>, vector<2x4xf32> -> vector<2x4xf32>
      %26 = vector.extract_strided_slice %25 {offsets = [0, 0], sizes = [1, 4], strides = [1, 1]} : vector<2x4xf32> to vector<1x4xf32>
      %27 = vector.extract_strided_slice %25 {offsets = [1, 0], sizes = [1, 4], strides = [1, 1]} : vector<2x4xf32> to vector<1x4xf32>
      %28 = arith.addf %26, %27 : vector<1x4xf32>
      %29 = arith.negf %28 : vector<1x4xf32>
      %30 = math.exp %29 : vector<1x4xf32>
      %cst_26 = arith.constant 1.000000e+00 : f32
      %31 = vector.broadcast %cst_26 : f32 to vector<1x4xf32>
      %32 = arith.addf %31, %30 : vector<1x4xf32>
      %33 = arith.divf %31, %32 : vector<1x4xf32>
      %c0_27 = arith.constant 0 : index
      %c0_28 = arith.constant 0 : index
      %c0_29 = arith.constant 0 : index
      %34 = vector.load %arg5[%c0_27, %c0_28, %c0_29] : memref<1x1x4xf32, #tpu.memory_space<vmem>>, vector<1x1x4xf32>
      %35 = vector.shape_cast %34 : vector<1x1x4xf32> to vector<1x4xf32>
      %36 = vector.shape_cast %33 : vector<1x4xf32> to vector<1x1x4xf32>
      tpu.vector_store %arg5[%c0_27, %c0_28, %c0_29], %36 {strides = array<i32>} : memref<1x1x4xf32, #tpu.memory_space<vmem>>, vector<1x1x4xf32>,
    } else {
    }
    return
  }
  func.func @transform_0(%arg0: i32, %arg1: i32) -> (i32, i32, i32) {
    %c0_i32 = arith.constant 0 : i32
    %c0_i32_0 = arith.constant 0 : i32
    return %arg0, %c0_i32, %arg1 : i32, i32, i32
  }
  func.func @transform_1(%arg0: i32, %arg1: i32) -> (i32, i32) {
    %c0_i32 = arith.constant 0 : i32
    %c0_i32_0 = arith.constant 0 : i32
    %c0_i32_1 = arith.constant 0 : i32
    return %c0_i32, %c0_i32_0 : i32, i32
  }
  func.func @transform_2(%arg0: i32, %arg1: i32) -> (i32, i32) {
    %c0_i32 = arith.constant 0 : i32
    %c0_i32_0 = arith.constant 0 : i32
    %c0_i32_1 = arith.constant 0 : i32
    return %c0_i32, %c0_i32_0 : i32, i32
  }
  func.func @transform_3(%arg0: i32, %arg1: i32) -> (i32, i32, i32) {
    %c0_i32 = arith.constant 0 : i32
    %c0_i32_0 = arith.constant 0 : i32
    %c0_i32_1 = arith.constant 0 : i32
    return %arg0, %c0_i32, %c0_i32_0 : i32, i32, i32
  }
}

</mosaic_0001>

<llo_original>
// kernel: tpu_custom_call.1
$region0: #{tpu_custom_call.1}
  #allocation0 [shape = 'u32[]', space=smem, size = 0x4, offset = 0x4, fixed_abs, tag = 'smem constant byte address 0x4 - core index']
  #allocation1 [shape = 'u32[144,128]{1,0:T(1,128)}', space=vmem, size = 0x12000, scoped, tag = 'internal scratch']
  #allocation2 [shape = 'f32[1,4]{1,0:T(1,128)}', space=vmem, size = 0x200, scoped, tag = 'scratch operand']
  #allocation3 [shape = 'f32[1,4]{1,0:T(1,128)}', space=vmem, size = 0x200, scoped, tag = 'scratch operand']
  %s0 = inlined_call_operand.hbm [shape: f32[2,4,256], index: 0, kind: input, shape index: {}]
  %s1 = inlined_call_operand.vmem [shape: f32[4,1], index: 1, kind: input, shape index: {}]
  %s2 = inlined_call_operand.vmem [shape: f32[1,4], index: 2, kind: input, shape index: {}]
  %s3 = inlined_call_operand.hbm [shape: f32[2,1,4], index: 3, kind: output, shape index: {}]
  %s4 = sld [smem:[#allocation0]]
  $region57: #{tpu_custom_call.1} parent=0
    _
  %s6 = ssub.s32 1, %s4
  %s7 = scalar_select 0, %s6, %s4
  $region1: #{tpu_custom_call.1} parent=0
    #allocation4 [shape = 'u8[8192]{0}', space=vmem, size = 0x2000, scoped, tag = 'input window, operand 0']
    #allocation5 [shape = 's32[2]{0}', space=sflag, size = 0x8, scoped, tag = 'scoped memory for tpu_custom_call.1']
    #allocation6 [shape = 's32[2]{0}', space=sflag, size = 0x8, scoped, tag = 'scoped memory for tpu_custom_call.1']
    #allocation7 [shape = 'u8[1024]{0}', space=vmem, size = 0x400, scoped, tag = 'output window, operand 0']
    %8 = vsyncpa [#allocation5], 0
    %s9 = scalar_lea.sflag [#allocation5], 1
    %10 = vsyncpa %s9, 0
    %11 = vsyncpa [#allocation6], 0
    %s12 = scalar_lea.sflag [#allocation6], 1
    %13 = vsyncpa %s12, 0
    loop: start=0, step=1, limit=4
    $region2: #{tpu_custom_call.1} parent=1 // loop_pre_header
      _
    $region3: #{tpu_custom_call.1} parent=1 // loop_header
      %s15 = sphi 0, %s19
      %p16 = scmp.ge.s32.totalorder %s15, 4
      %s22 = sphi 0, %s34
      %s23 = sphi 0, %s30
      %s24 = sphi 0, %s22
      %s25 = sphi 0, %s23
      %s26 = sphi 0, %s24
      %s27 = sphi 0, %s25
      %s39 = sphi 0, %s41
      %s42 = sphi 0, %s39
      %s43 = sphi 0, %s42
      %s59 = sphi 0, %s43
      %s63 = sphi 0, %s63
      %s65 = sphi 0, %s63
      %s66 = sphi 0, %s65
      %s80 = sphi 0, %s66
      %s84 = sphi 0, %s84
      %s86 = sphi 0, %s84
      %s87 = sphi 0, %s86
      %s101 = sphi 0, %s87
      %s107 = sphi 0, %s109
      %s110 = sphi 0, %s107
      %s111 = sphi 0, %s110
      %s127 = sphi 0, %s111
    $region4: #{tpu_custom_call.1} parent=1 // loop_header_branch
      %18 = sbr.rel (%p16) target = $region8
    $region5: #{tpu_custom_call.1} parent=1 // loop_body
      %s20 = ssub.s32 %s15, 1
      %s21 = ssub.s32 %s15, 2
      %s28 = sadd.s32 1, %s23
      %p29 = scmp.ge.s32.totalorder %s28, 1
      %s30 = scalar_select %p29, 0, %s28
      %s31 = sadd.s32 1, %s22
      %s32 = scalar_select %p29, %s31, %s22
      %p33 = scmp.ge.s32.totalorder %s32, 2
      %s34 = scalar_select %p33, 0, %s32
      %s35 = ssub.s32 %s22, %s34
      %s36 = ssub.s32 %s23, %s30
      %s37 = sor.u32 %s35, %s36
      %p38 = scmp.eq.s32.totalorder %s37, 0
      %s40 = sadd.s32 %s39, 1
      %s41 = scalar_select %p38, %s39, %s40
      %p44 = pneg %p38
      %p45 = scmp.eq.s32.totalorder %s15, 1
      %p46 = por %p44, %p45
      %p47 = scmp.ne.s32.totalorder %s39, %s42
      %p48 = scmp.eq.s32.totalorder %s15, 0
      %p49 = por %p47, %p48
      %p50 = scmp.ne.s32.totalorder %s39, %s42
      %p51 = scmp.eq.s32.totalorder %s20, 1
      %p52 = por %p50, %p51
      %p53 = scmp.ne.s32.totalorder %s42, %s43
      %p54 = scmp.eq.s32.totalorder %s20, 0
      %p55 = por %p53, %p54
      %p56 = scmp.ne.s32.totalorder %s42, %s43
      %p57 = scmp.eq.s32.totalorder %s21, 1
      %p58 = por %p56, %p57
      %p60 = scmp.ne.s32.totalorder %s43, %s59
      %p61 = scmp.eq.s32.totalorder %s21, 0
      %p62 = por %p60, %p61
      %s64 = sadd.s32 %s63, 1
      %p67 = scmp.eq.s32.totalorder %s15, 1
      %p68 = scmp.ne.s32.totalorder %s63, %s65
      %p69 = scmp.eq.s32.totalorder %s15, 0
      %p70 = por %p68, %p69
      %p71 = scmp.ne.s32.totalorder %s63, %s65
      %p72 = scmp.eq.s32.totalorder %s20, 1
      %p73 = por %p71, %p72
      %p74 = scmp.ne.s32.totalorder %s65, %s66
      %p75 = scmp.eq.s32.totalorder %s20, 0
      %p76 = por %p74, %p75
      %p77 = scmp.ne.s32.totalorder %s65, %s66
      %p78 = scmp.eq.s32.totalorder %s21, 1
      %p79 = por %p77, %p78
      %p81 = scmp.ne.s32.totalorder %s66, %s80
      %p82 = scmp.eq.s32.totalorder %s21, 0
      %p83 = por %p81, %p82
      %s85 = sadd.s32 %s84, 1
      %p88 = scmp.eq.s32.totalorder %s15, 1
      %p89 = scmp.ne.s32.totalorder %s84, %s86
      %p90 = scmp.eq.s32.totalorder %s15, 0
      %p91 = por %p89, %p90
      %p92 = scmp.ne.s32.totalorder %s84, %s86
      %p93 = scmp.eq.s32.totalorder %s20, 1
      %p94 = por %p92, %p93
      %p95 = scmp.ne.s32.totalorder %s86, %s87
      %p96 = scmp.eq.s32.totalorder %s20, 0
      %p97 = por %p95, %p96
      %p98 = scmp.ne.s32.totalorder %s86, %s87
      %p99 = scmp.eq.s32.totalorder %s21, 1
      %p100 = por %p98, %p99
      %p102 = scmp.ne.s32.totalorder %s87, %s101
      %p103 = scmp.eq.s32.totalorder %s21, 0
      %p104 = por %p102, %p103
      %s105 = ssub.s32 %s22, %s34
      %p106 = scmp.eq.s32.totalorder %s105, 0
      %s108 = sadd.s32 %s107, 1
      %s109 = scalar_select %p106, %s107, %s108
      %p112 = pneg %p106
      %p113 = scmp.eq.s32.totalorder %s15, 1
      %p114 = por %p112, %p113
      %p115 = scmp.ne.s32.totalorder %s107, %s110
      %p116 = scmp.eq.s32.totalorder %s15, 0
      %p117 = por %p115, %p116
      %p118 = scmp.ne.s32.totalorder %s107, %s110
      %p119 = scmp.eq.s32.totalorder %s20, 1
      %p120 = por %p118, %p119
      %p121 = scmp.ne.s32.totalorder %s110, %s111
      %p122 = scmp.eq.s32.totalorder %s20, 0
      %p123 = por %p121, %p122
      %p124 = scmp.ne.s32.totalorder %s110, %s111
      %p125 = scmp.eq.s32.totalorder %s21, 1
      %p126 = por %p124, %p125
      %p128 = scmp.ne.s32.totalorder %s111, %s127
      %p129 = scmp.eq.s32.totalorder %s21, 0
      %p130 = por %p128, %p129
      %p131 = scmp.le.s32.totalorder 1, %s15
      %p132 = scmp.lt.s32.totalorder %s15, 3
      %p133 = pnand %p131, %p132
      %p134 = pneg %p133
      // Predicated region
      $region9: #{tpu_custom_call.1} parent=5 // pred_check
        _
      $region10: #{tpu_custom_call.1} parent=5 // pred_check_branch
        %136 = sbr.rel (%p133) target = $region12
      $region11: #{tpu_custom_call.1} parent=5 // pred_region
        %s137 = ssub.s32 %s15, 1
        // Predicated region
        $region13: #{tpu_custom_call.1} parent=11 // pred_check
          %p138 = pneg %p76
        $region14: #{tpu_custom_call.1} parent=11 // pred_check_branch
          %140 = sbr.rel (%p138) target = $region16
        $region15: #{tpu_custom_call.1} parent=11 // pred_region
          _
        $region16: #{tpu_custom_call.1} parent=11 // pred_fallthru
          _
        // Predicated region
        $region17: #{tpu_custom_call.1} parent=11 // pred_check
          %p141 = pneg %p97
        $region18: #{tpu_custom_call.1} parent=11 // pred_check_branch
          %143 = sbr.rel (%p141) target = $region20
        $region19: #{tpu_custom_call.1} parent=11 // pred_region
          _
        $region20: #{tpu_custom_call.1} parent=11 // pred_fallthru
          _
      $region12: #{tpu_custom_call.1} parent=5 // pred_fallthru
        _
      %p144 = scmp.lt.s32.totalorder %s15, 2
      // Predicated region
      $region21: #{tpu_custom_call.1} parent=5 // pred_check
        %p145 = pneg %p144
      $region22: #{tpu_custom_call.1} parent=5 // pred_check_branch
        %147 = sbr.rel (%p145) target = $region24
      $region23: #{tpu_custom_call.1} parent=5 // pred_region
        // Predicated region
        $region25: #{tpu_custom_call.1} parent=23 // pred_check
          %p148 = pneg %p49
        $region26: #{tpu_custom_call.1} parent=23 // pred_check_branch
          %150 = sbr.rel (%p148) target = $region28
        $region27: #{tpu_custom_call.1} parent=23 // pred_region
          %s151 = sand.u32 %s39, 1
          %s152 = scalar_lea.sflag [#allocation5], %s151
          %s153 = sand.u32 %s39, 1
          %s154 = smul.addr %s153, 8
          %s155 = scalar_lea.vmem [#allocation4], %s154
          %s156 = smul.u32 2, %s23
          %s158 = ssub.s32 128, 128
          %159 = vsyncadd %s152, %s158
          %s160 = smul.addr %s22, 2
          %s161 = sadd.s32 %s156, %s160
          %s162 = smul.addr %s161, 64
          %s163 = scalar_lea.hbm %s0, %s162
          %s165 = sshll.u32 %s155, 4
          %s166 = int_to_ptr.vmem [resolvable:$true] %s165
          %168 = dma.hbm_to_vmem [thread:$0]  %s163, 128, %s166, %s152
        $region28: #{tpu_custom_call.1} parent=23 // pred_fallthru
          _
      $region24: #{tpu_custom_call.1} parent=5 // pred_fallthru
        _
      %p169 = scmp.le.s32.totalorder 1, %s15
      %p170 = scmp.lt.s32.totalorder %s15, 3
      %p171 = pnand %p169, %p170
      %p172 = pneg %p171
      // Predicated region
      $region29: #{tpu_custom_call.1} parent=5 // pred_check
        _
      $region30: #{tpu_custom_call.1} parent=5 // pred_check_branch
        %174 = sbr.rel (%p171) target = $region32
      $region31: #{tpu_custom_call.1} parent=5 // pred_region
        %s175 = ssub.s32 %s15, 1
        %s176 = sand.u32 %s42, 1
        %s177 = scalar_lea.sflag [#allocation5], %s176
        %s178 = sand.u32 %s42, 1
        %s179 = smul.addr %s178, 8
        %s180 = scalar_lea.vmem [#allocation4], %s179
        // Predicated region
        $region33: #{tpu_custom_call.1} parent=31 // pred_check
          %p181 = pneg %p55
        $region34: #{tpu_custom_call.1} parent=31 // pred_check_branch
          %183 = sbr.rel (%p181) target = $region36
        $region35: #{tpu_custom_call.1} parent=31 // pred_region
          %184 = dma.done %s177, 128
        $region36: #{tpu_custom_call.1} parent=31 // pred_fallthru
          _
        %s185 = sand.u32 %s42, 1
        %s186 = scalar_lea.sflag [#allocation5], %s185
        %s187 = sand.u32 %s42, 1
        %s188 = smul.addr %s187, 8
        %s189 = scalar_lea.vmem [#allocation4], %s188
        %p190 = pneg %p55
        %p191 = pneg %p52
        %p192 = pneg %p76
        %p193 = pneg %p73
        %p194 = pneg %p97
        %p195 = pneg %p94
        %p196 = pneg %p123
        %p197 = pneg %p120
        %s198 = sand.u32 %s110, 1
        %s199 = scalar_lea.sflag [#allocation6], %s198
        %s200 = sand.u32 %s110, 1
        %s201 = scalar_lea.vmem [#allocation7], %s200
        %s202 = smul.u32 2, %s25
        %p203 = scmp.eq.s32.totalorder %s25, 0
        // Predicated region
        $region37: #{tpu_custom_call.1} parent=31 // pred_check
          %p204 = pneg %p203
        $region38: #{tpu_custom_call.1} parent=31 // pred_check_branch
          %206 = sbr.rel (%p204) target = $region40
        $region39: #{tpu_custom_call.1} parent=31 // pred_region
          %vm207 = vcmask 24576
          %208 = vst.msk [vmem:[#allocation2] sm:$0x1] %vm207, 0.0
          %209 = vst.msk [vmem:[#allocation3] sm:$0x1] %vm207, -inf
        $region40: #{tpu_custom_call.1} parent=31 // pred_fallthru
          _
        %v210 = vld [vmem:[%s180] sm:$0xff]
        %v211 = vld [vmem:[#allocation2] sm:$0x1]
        %v213 = vcombine.high %v210, %v210
        %vm215 = vcmask 1043456
        %v216 = vsel %vm215, %v210, 0.0
        %v217 = vsel %vm215, %v213, 0.0
        %v218 = vadd.f32 %v216, %v217
        %219 = vadd.xlane.f32.xlu0 %v218
        %v220 = vpop.xlane.xlu0 %219
        %v222 = vlaneseq
        %v223 = vshrl.u32 %v222, 7
        %v224 = vsub.s32 0, %v223
        %v225 = vrot.slane %v220, %v224
        %v226 = vlaneseq
        %v227 = vshrl.u32 %v226, 7
        %v228 = vsub.s32 1, %v227
        %v229 = vrot.slane %v220, %v228
        %v230 = vlaneseq
        %v231 = vshrl.u32 %v230, 7
        %v232 = vsub.s32 2, %v231
        %v233 = vrot.slane %v220, %v232
        %v234 = vlaneseq
        %v235 = vshrl.u32 %v234, 7
        %v236 = vsub.s32 3, %v235
        %v237 = vrot.slane %v220, %v236
        %v238 = vcombine.low %v225, %v229
        %v239 = vcombine.low %v233, %v237
        %v241 = vunpack.c.l.s4 1966171168
        %v242 = vunpack.c.0.s8 %v241
        %v243 = vlaneseq
        %v244 = vshrl.u32 %v243, 7
        %v245 = vsub.s32 %v242, %v244
        %v246 = vrot.slane %v238, %v245
        %v248 = vunpack.c.l.s4 1966171168
        %v249 = vunpack.c.0.s8 %v248
        %v250 = vlaneseq
        %v251 = vshrl.u32 %v250, 7
        %v252 = vsub.s32 %v249, %v251
        %v253 = vrot.slane %v239, %v252
        %v254 = vcombine.low %v246, %v253
        %v256 = vunpack.c.l.s4 1966171168
        %v257 = vunpack.c.0.s8 %v256
        %v258 = vlaneseq
        %v259 = vshrl.u32 %v258, 7
        %v260 = vsub.s32 %v257, %v259
        %v261 = vrot.slane %v254, %v260
        %262 = vset.pattern.permute.xlu0 0
        %263 = vperm.xlu0 %262, %v261
        %v264 = vpop.permute.xlu0 %263
        %v265 = vlaneseq
        %v266 = vand.u32 %v265, 127
        %v267 = vlaneseq
        %v268 = vshrl.u32 %v267, 7
        %v269 = vsub.s32 %v266, %v268
        %v270 = vrot.slane %v264, %v269
        %v272 = vunpack.c.l.s4 1966171168
        %v273 = vunpack.c.0.s8 %v272
        %v274 = vlaneseq
        %v275 = vshrl.u32 %v274, 7
        %v276 = vsub.s32 %v273, %v275
        %v277 = vrot.slane %v270, %v276
        %v279 = vunpack.c.l.s4 1966171168
        %v280 = vunpack.c.0.s8 %v279
        %v281 = vlaneseq
        %v282 = vshrl.u32 %v281, 7
        %v283 = vsub.s32 %v280, %v282
        %v284 = vrot.slane %v277, %v283
        %v286 = vadd.f32 %v211, %v284
        %vm287 = vcmask 24576
        %288 = vst.msk [vmem:[#allocation2] sm:$0x1] %vm287, %v286
        %v289 = vld [vmem:[#allocation3] sm:$0x1]
        %v290 = vsel %vm215, %v210, -inf
        %v291 = vsel %vm215, %v213, -inf
        %v292 = vmax.f32 %v290, %v291
        %293 = vmax.xlane.f32.xlu0 %v292
        %v294 = vpop.xlane.xlu0 %293
        %v296 = vlaneseq
        %v297 = vshrl.u32 %v296, 7
        %v298 = vsub.s32 0, %v297
        %v299 = vrot.slane %v294, %v298
        %v300 = vlaneseq
        %v301 = vshrl.u32 %v300, 7
        %v302 = vsub.s32 1, %v301
        %v303 = vrot.slane %v294, %v302
        %v304 = vlaneseq
        %v305 = vshrl.u32 %v304, 7
        %v306 = vsub.s32 2, %v305
        %v307 = vrot.slane %v294, %v306
        %v308 = vlaneseq
        %v309 = vshrl.u32 %v308, 7
        %v310 = vsub.s32 3, %v309
        %v311 = vrot.slane %v294, %v310
        %v312 = vcombine.low %v299, %v303
        %v313 = vcombine.low %v307, %v311
        %v315 = vunpack.c.l.s4 1966171168
        %v316 = vunpack.c.0.s8 %v315
        %v317 = vlaneseq
        %v318 = vshrl.u32 %v317, 7
        %v319 = vsub.s32 %v316, %v318
        %v320 = vrot.slane %v312, %v319
        %v322 = vunpack.c.l.s4 1966171168
        %v323 = vunpack.c.0.s8 %v322
        %v324 = vlaneseq
        %v325 = vshrl.u32 %v324, 7
        %v326 = vsub.s32 %v323, %v325
        %v327 = vrot.slane %v313, %v326
        %v328 = vcombine.low %v320, %v327
        %v330 = vunpack.c.l.s4 1966171168
        %v331 = vunpack.c.0.s8 %v330
        %v332 = vlaneseq
        %v333 = vshrl.u32 %v332, 7
        %v334 = vsub.s32 %v331, %v333
        %v335 = vrot.slane %v328, %v334
        %336 = vset.pattern.permute.xlu0 0
        %337 = vperm.xlu0 %336, %v335
        %v338 = vpop.permute.xlu0 %337
        %v339 = vlaneseq
        %v340 = vshrl.u32 %v339, 7
        %v341 = vsub.s32 %v266, %v340
        %v342 = vrot.slane %v338, %v341
        %v344 = vunpack.c.l.s4 1966171168
        %v345 = vunpack.c.0.s8 %v344
        %v346 = vlaneseq
        %v347 = vshrl.u32 %v346, 7
        %v348 = vsub.s32 %v345, %v347
        %v349 = vrot.slane %v342, %v348
        %v351 = vunpack.c.l.s4 1966171168
        %v352 = vunpack.c.0.s8 %v351
        %v353 = vlaneseq
        %v354 = vshrl.u32 %v353, 7
        %v355 = vsub.s32 %v352, %v354
        %v356 = vrot.slane %v349, %v355
        %v358 = vmax.f32 %v289, %v356
        %359 = vst.msk [vmem:[#allocation3] sm:$0x1] %vm287, %v358
        // Predicated region
        $region41: #{tpu_custom_call.1} parent=31 // pred_check
          %p360 = pneg %p203
        $region42: #{tpu_custom_call.1} parent=31 // pred_check_branch
          %362 = sbr.rel (%p360) target = $region44
        $region43: #{tpu_custom_call.1} parent=31 // pred_region
          %v363 = vld [vmem:[#allocation2] sm:$0x1]
          %v364 = vmul.f32 %v363, 0.00390625
          %v365 = vld [vmem:[#allocation3] sm:$0x1]
          %v366 = vld [vmem:[%s1] sm:$0xf]
          %v367 = vld [vmem:[%s2] sm:$0x1]
          %v369 = vlaneseq
          %v370 = vshrl.u32 %v369, 7
          %v371 = vsub.s32 0, %v370
          %v372 = vrot.slane %v365, %v371
          %vm374 = vcmask 1040384
          %v375 = vsel %vm374, %v364, %v372
          %vm376 = vcmask 31744
          %v378 = vsel %vm376, %v375, 0
          %v381 = vsel %vm215, %v366, 0
          %383 = vmatprep.subr.mxu0 0.0
          %384 = vmatpush1.msra.mxu0 %v381
          %385 = vmatprep.subr.mxu0 0.0
          %386 = vmatpush1.msra.mxu0 0.0
          %387 = vmatprep.subr.mxu0 0.0
          %388 = vmatpush1.msra.mxu0 0.0
          %389 = vmatprep.subr.mxu0 0.0
          %390 = vmatpush1.msra.mxu0 0.0
          %391 = vmatprep.subr.mxu0 0.0
          %392 = vmatpush1.msra.mxu0 0.0
          %393 = vmatprep.subr.mxu0 0.0
          %394 = vmatpush1.msra.mxu0 0.0
          %395 = vmatprep.subr.mxu0 0.0
          %396 = vmatpush1.msra.mxu0 0.0
          %397 = vmatprep.subr.mxu0 0.0
          %398 = vmatpush1.msra.mxu0 0.0
          %399 = vmatprep.subr.mxu0 0.0
          %400 = vmatpush1.msra.mxu0 0.0
          %401 = vmatprep.subr.mxu0 0.0
          %402 = vmatpush1.msra.mxu0 0.0
          %403 = vmatprep.subr.mxu0 0.0
          %404 = vmatpush1.msra.mxu0 0.0
          %405 = vmatprep.subr.mxu0 0.0
          %406 = vmatpush1.msra.mxu0 0.0
          %407 = vmatprep.subr.mxu0 0.0
          %408 = vmatpush1.msra.mxu0 0.0
          %409 = vmatprep.subr.mxu0 0.0
          %410 = vmatpush1.msra.mxu0 0.0
          %411 = vmatprep.subr.mxu0 0.0
          %412 = vmatpush1.msra.mxu0 0.0
          %413 = vmatprep.subr.mxu0 0.0
          %414 = vmatpush1.msra.mxu0 0.0
          %415 = vmatprep.subr.mxu0 0.0
          %416 = vmatpush1.msra.mxu0 0.0
          %417 = vmatprep.subr.mxu0 0.0
          %418 = vmatpush1.msra.mxu0 0.0
          %419 = vmatprep.subr.mxu0 0.0
          %420 = vmatpush1.msra.mxu0 0.0
          %421 = vmatprep.subr.mxu0 0.0
          %422 = vmatpush1.msra.mxu0 0.0
          %423 = vmatprep.subr.mxu0 0.0
          %424 = vmatpush1.msra.mxu0 0.0
          %425 = vmatprep.subr.mxu0 0.0
          %426 = vmatpush1.msra.mxu0 0.0
          %427 = vmatprep.subr.mxu0 0.0
          %428 = vmatpush1.msra.mxu0 0.0
          %429 = vmatprep.subr.mxu0 0.0
          %430 = vmatpush1.msra.mxu0 0.0
          %431 = vmatprep.subr.mxu0 0.0
          %432 = vmatpush1.msra.mxu0 0.0
          %433 = vmatprep.subr.mxu0 0.0
          %434 = vmatpush1.msra.mxu0 0.0
          %435 = vmatprep.subr.mxu0 0.0
          %436 = vmatpush1.msra.mxu0 0.0
          %437 = vmatprep.subr.mxu0 0.0
          %438 = vmatpush1.msra.mxu0 0.0
          %439 = vmatprep.subr.mxu0 0.0
          %440 = vmatpush1.msra.mxu0 0.0
          %441 = vmatprep.subr.mxu0 0.0
          %442 = vmatpush1.msra.mxu0 0.0
          %443 = vmatprep.subr.mxu0 0.0
          %444 = vmatpush1.msra.mxu0 0.0
          %445 = vmatprep.subr.mxu0 0.0
          %446 = vmatpush1.msra.mxu0 0.0
          %447 = vmatprep.mubr.f32.mxu0 0.0
          %448 = vmatmul.mubr.f32.gmra.mrb[0].mxu0 %v378
          %v449 = vpop.f32.mrb[0].mxu0
          %v450 = vadd.f32 0.0, %v449
          %v451 = vpop.f32.mrb[0].mxu0
          %452 = vdwg.mxu0
          %v453 = vmax.f32 %v450, 0.0
          %vm454 = vcmask 7168
          %v456 = vsel %vm454, %v453, 0
          %v459 = vsel %vm374, %v367, 0
          %461 = vmatprep.subr.mxu0 0.0
          %462 = vmatpush1.msra.mxu0 %v459
          %463 = vmatprep.subr.mxu0 0.0
          %464 = vmatpush1.msra.mxu0 0.0
          %465 = vmatprep.subr.mxu0 0.0
          %466 = vmatpush1.msra.mxu0 0.0
          %467 = vmatprep.subr.mxu0 0.0
          %468 = vmatpush1.msra.mxu0 0.0
          %469 = vmatprep.subr.mxu0 0.0
          %470 = vmatpush1.msra.mxu0 0.0
          %471 = vmatprep.subr.mxu0 0.0
          %472 = vmatpush1.msra.mxu0 0.0
          %473 = vmatprep.subr.mxu0 0.0
          %474 = vmatpush1.msra.mxu0 0.0
          %475 = vmatprep.subr.mxu0 0.0
          %476 = vmatpush1.msra.mxu0 0.0
          %477 = vmatprep.subr.mxu0 0.0
          %478 = vmatpush1.msra.mxu0 0.0
          %479 = vmatprep.subr.mxu0 0.0
          %480 = vmatpush1.msra.mxu0 0.0
          %481 = vmatprep.subr.mxu0 0.0
          %482 = vmatpush1.msra.mxu0 0.0
          %483 = vmatprep.subr.mxu0 0.0
          %484 = vmatpush1.msra.mxu0 0.0
          %485 = vmatprep.subr.mxu0 0.0
          %486 = vmatpush1.msra.mxu0 0.0
          %487 = vmatprep.subr.mxu0 0.0
          %488 = vmatpush1.msra.mxu0 0.0
          %489 = vmatprep.subr.mxu0 0.0
          %490 = vmatpush1.msra.mxu0 0.0
          %491 = vmatprep.subr.mxu0 0.0
          %492 = vmatpush1.msra.mxu0 0.0
          %493 = vmatprep.subr.mxu0 0.0
          %494 = vmatpush1.msra.mxu0 0.0
          %495 = vmatprep.subr.mxu0 0.0
          %496 = vmatpush1.msra.mxu0 0.0
          %497 = vmatprep.subr.mxu0 0.0
          %498 = vmatpush1.msra.mxu0 0.0
          %499 = vmatprep.subr.mxu0 0.0
          %500 = vmatpush1.msra.mxu0 0.0
          %501 = vmatprep.subr.mxu0 0.0
          %502 = vmatpush1.msra.mxu0 0.0
          %503 = vmatprep.subr.mxu0 0.0
          %504 = vmatpush1.msra.mxu0 0.0
          %505 = vmatprep.subr.mxu0 0.0
          %506 = vmatpush1.msra.mxu0 0.0
          %507 = vmatprep.subr.mxu0 0.0
          %508 = vmatpush1.msra.mxu0 0.0
          %509 = vmatprep.subr.mxu0 0.0
          %510 = vmatpush1.msra.mxu0 0.0
          %511 = vmatprep.subr.mxu0 0.0
          %512 = vmatpush1.msra.mxu0 0.0
          %513 = vmatprep.subr.mxu0 0.0
          %514 = vmatpush1.msra.mxu0 0.0
          %515 = vmatprep.subr.mxu0 0.0
          %516 = vmatpush1.msra.mxu0 0.0
          %517 = vmatprep.subr.mxu0 0.0
          %518 = vmatpush1.msra.mxu0 0.0
          %519 = vmatprep.subr.mxu0 0.0
          %520 = vmatpush1.msra.mxu0 0.0
          %521 = vmatprep.subr.mxu0 0.0
          %522 = vmatpush1.msra.mxu0 0.0
          %523 = vmatprep.subr.mxu0 0.0
          %524 = vmatpush1.msra.mxu0 0.0
          %525 = vmatprep.mubr.f32.mxu0 0.0
          %526 = vmatmul.mubr.f32.gmra.mrb[0].mxu0 %v456
          %v527 = vpop.f32.mrb[0].mxu0
          %v528 = vadd.f32 0.0, %v527
          %v529 = vpop.f32.mrb[0].mxu0
          %530 = vdwg.mxu0
          %v532 = vrot.slane %v528, 1
          %v534 = vadd.f32 %v528, %v532
          %v535 = vxor.u32 %v534, 2147483648
          %v536 = vmul.f32 %v535, 1.442695
          %v537 = vpow.pop %v536
          %v538 = vadd.f32 %v537, 1.0
          %v539 = vrcp.pop %v538
          %v540 = vmul.f32 1.0, %v539
          %541 = vst.msk [vmem:[%s201] sm:$0x1] %vm287, %v540
        $region44: #{tpu_custom_call.1} parent=31 // pred_fallthru
          _
        %s542 = sand.u32 %s110, 1
        %s543 = scalar_lea.sflag [#allocation6], %s542
        %s544 = sand.u32 %s110, 1
        %s545 = scalar_lea.vmem [#allocation7], %s544
        // Predicated region
        $region45: #{tpu_custom_call.1} parent=31 // pred_check
          %p546 = pneg %p120
        $region46: #{tpu_custom_call.1} parent=31 // pred_check_branch
          %548 = sbr.rel (%p546) target = $region48
        $region47: #{tpu_custom_call.1} parent=31 // pred_region
          %s550 = ssub.s32 16, 16
          %551 = vsyncadd %s543, %s550
          %s552 = smul.addr %s24, 16
          %s553 = scalar_lea.hbm %s3, %s552
          %s555 = sshll.u32 %s545, 4
          %s556 = int_to_ptr.vmem [resolvable:$true] %s555
          %558 = dma.vmem_to_hbm [thread:$0]  %s556, 16, %s553, %s543
        $region48: #{tpu_custom_call.1} parent=31 // pred_fallthru
          _
      $region32: #{tpu_custom_call.1} parent=5 // pred_fallthru
        _
      %p559 = scmp.le.s32.totalorder 2, %s15
      // Predicated region
      $region49: #{tpu_custom_call.1} parent=5 // pred_check
        %p560 = pneg %p559
      $region50: #{tpu_custom_call.1} parent=5 // pred_check_branch
        %562 = sbr.rel (%p560) target = $region52
      $region51: #{tpu_custom_call.1} parent=5 // pred_region
        %s563 = ssub.s32 %s15, 2
        // Predicated region
        $region53: #{tpu_custom_call.1} parent=51 // pred_check
          %p564 = pneg %p126
        $region54: #{tpu_custom_call.1} parent=51 // pred_check_branch
          %566 = sbr.rel (%p564) target = $region56
        $region55: #{tpu_custom_call.1} parent=51 // pred_region
          %s567 = sand.u32 %s111, 1
          %s568 = scalar_lea.sflag [#allocation6], %s567
          %s569 = sand.u32 %s111, 1
          %s570 = scalar_lea.vmem [#allocation7], %s569
          %571 = dma.done %s568, 16
        $region56: #{tpu_custom_call.1} parent=51 // pred_fallthru
          _
      $region52: #{tpu_custom_call.1} parent=5 // pred_fallthru
        _
    $region6: #{tpu_custom_call.1} parent=1 // loop_footer
      %s19 = sadd.s32 1, %s15
    $region7: #{tpu_custom_call.1} parent=1 // loop_footer_branch
      %14 = sbr.rel target = $region3
    $region8: #{tpu_custom_call.1} parent=1 // loop_exit
      _
    %572 = vsyncpa [#allocation5], 1
    %s573 = scalar_lea.sflag [#allocation5], 1
    %574 = vsyncpa %s573, 1
    %575 = vsyncpa [#allocation6], 1
    %s576 = scalar_lea.sflag [#allocation6], 1
    %577 = vsyncpa %s576, 1

</llo_original>
